<compile_context>
chip_gen: v6e
topology: v6e:2x2x1
jax: 0.10.0
libtpu: 0.0.40
codegen_flags: <defaults>
</compile_context>

<pallas_src>
import functools

import jax
import jax.numpy as jnp
from jax.experimental import pallas as pl
from jax.experimental.pallas import tpu as pltpu


def _smearing_kernel(dist_ref, offset_ref, out_ref, *, coeff):
    # Default layout:    dist (TN, 1), offset (1, G), out (TN, G)
    # Transposed layout: dist (1, TN), offset (G, 1), out (G, TN)
    # Broadcasting makes the same body correct for both.
    d = dist_ref[...]
    off = offset_ref[...]
    diff = d - off
    out_ref[...] = jnp.exp(coeff * diff * diff).astype(out_ref.dtype)


def _round_up(x, m):
    return ((x + m - 1) // m) * m


def gaussian_smearing(dist, offset, coeff, *, tile_n=8192,
                      out_dtype=jnp.float32, transposed=False):
    """dist: any shape (flattened to N); offset: (G,); coeff: python scalar.

    transposed=False (default): returns (N, G)  -- same as the PyTorch module.
    transposed=True:            returns (G, N)  -- lane-dense layout for
        consumers that can take transposed features (do NOT transpose it back
        yourself; that extra HBM pass cancels the benefit).
    """
    dist_flat = jnp.reshape(dist, (-1,)).astype(jnp.float32)
    n = dist_flat.shape[0]
    g = offset.shape[0]
    offset = offset.astype(jnp.float32)

    if n == 0:  # degenerate: empty edge set
        return jnp.zeros((g, 0) if transposed else (0, g), out_dtype)

    kernel = functools.partial(_smearing_kernel, coeff=float(coeff))

    # Tiling along the (flattened) distance axis:
    #  * n <= tile_n: a single block equal to the full array shape (always a
    #    legal block shape, no padding, no ragged edge, guaranteed clean).
    #  * n  > tile_n: hardware-aligned tiles (multiple of 8 rows / 128 lanes);
    #    the last block may be partial -- its out-of-bounds output elements
    #    are dropped by the pipeline, so out_shape stays exactly (N, G) and we
    #    never pay a post-kernel slice/copy pass over the output.
    granule = 128 if transposed else 8
    t = n if n <= tile_n else _round_up(tile_n, granule)
    grid = pl.cdiv(n, t)
    n_pad = grid * t
    if n_pad != n:
        # Cheap O(N) pad of the 1-D distances only, so *input* reads are
        # always in bounds (deterministic values feed the discarded tail).
        dist_flat = jnp.pad(dist_flat, (0, n_pad - n))

    if transposed:
        # Lane-dense path: distances on the lane (last) axis, output (G, N).
        dist_2d = dist_flat.reshape(1, n_pad)
        offset_2d = offset.reshape(g, 1)
        out_shape = jax.ShapeDtypeStruct((g, n), out_dtype)
        in_specs = [pl.BlockSpec((1, t), lambda i: (0, i)),
                    pl.BlockSpec((g, 1), lambda i: (0, 0))]
        out_spec = pl.BlockSpec((g, t), lambda i: (0, i))
    else:
        # Default path: keeps the module's (N, G) output contract.
        dist_2d = dist_flat.reshape(n_pad, 1)
        offset_2d = offset.reshape(1, g)
        out_shape = jax.ShapeDtypeStruct((n, g), out_dtype)
        in_specs = [pl.BlockSpec((t, 1), lambda i: (i, 0)),
                    pl.BlockSpec((1, g), lambda i: (0, 0))]
        out_spec = pl.BlockSpec((t, g), lambda i: (i, 0))

    return pl.pallas_call(
        kernel,
        out_shape=out_shape,
        grid_spec=pltpu.PrefetchScalarGridSpec(
            num_scalar_prefetch=0,
            grid=(grid,),
            in_specs=in_specs,
            out_specs=out_spec,
        ),
        compiler_params=pltpu.CompilerParams(
            dimension_semantics=("parallel",),
        ),
    )(dist_2d, offset_2d)


def make_gaussian_smearing_params(start=0.0, stop=5.0, num_gaussians=50):
    """Deterministic parameter setup matching the PyTorch __init__."""
    offset = jnp.linspace(start, stop, num_gaussians, dtype=jnp.float32)
    step = float(offset[1] - offset[0])
    coeff = -0.5 / step ** 2
    return offset, coeff


if __name__ == "__main__":
    start, stop, num_gaussians = 0.0, 5.0, 50
    offset, coeff = make_gaussian_smearing_params(start, stop, num_gaussians)

    key = jax.random.PRNGKey(0)
    n_edges = 200  # small; not a multiple of 8/128 -> exercises full-dim blocks
    dist = jax.random.uniform(key, (n_edges,), jnp.float32, minval=0.0, maxval=5.0)

    # Reference in plain JAX (same math as the PyTorch forward).
    ref = jnp.exp(coeff * (dist[:, None] - offset[None, :]) ** 2)

    # Default (N, G) path -- spec-compliant output layout.
    out = gaussian_smearing(dist, offset, coeff)
    out = jax.block_until_ready(out)
    assert out.shape == (n_edges, num_gaussians)
    assert out.dtype == jnp.float32
    assert jnp.allclose(out, ref, atol=1e-6, rtol=1e-6)

    # Opt-in lane-dense (G, N) path -- for consumers that accept transposed features.
    out_t = gaussian_smearing(dist, offset, coeff, transposed=True)
    out_t = jax.block_until_ready(out_t)
    assert out_t.shape == (num_gaussians, n_edges)
    assert jnp.allclose(out_t, ref.T, atol=1e-6, rtol=1e-6)

    print("KERNEL_OK")
</pallas_src>

<mosaic_0001>
module attributes {stable_mosaic.version = 11 : i64} {
  func.func @_smearing_kernel(%arg0: i32, %arg1: memref<200x1xf32, #tpu.memory_space<vmem>>, %arg2: memref<1x50xf32, #tpu.memory_space<vmem>>, %arg3: memref<200x50xf32, #tpu.memory_space<vmem>>) attributes {dimension_semantics = [#tpu.dimension_semantics<parallel>], iteration_bounds = array<i64: 1>, scalar_prefetch = 0 : i64, scratch_operands = 0 : i64, tpu.core_type = #tpu.core_type<tc>, window_params = [{transform_indices = @transform_0, window_bounds = array<i64: 200, 1>}, {pipeline_mode = #tpu.pipeline_mode<synchronous>, transform_indices = @transform_1, window_bounds = array<i64: 1, 50>}, {transform_indices = @transform_2, window_bounds = array<i64: 200, 50>}]} {
    %c0 = arith.constant 0 : index
    %c0_0 = arith.constant 0 : index
    %0 = vector.load %arg1[%c0, %c0_0] : memref<200x1xf32, #tpu.memory_space<vmem>>, vector<200x1xf32>
    %c0_1 = arith.constant 0 : index
    %c0_2 = arith.constant 0 : index
    %1 = vector.load %arg2[%c0_1, %c0_2] : memref<1x50xf32, #tpu.memory_space<vmem>>, vector<1x50xf32>
    %2 = vector.broadcast %0 : vector<200x1xf32> to vector<200x50xf32>
    %3 = vector.broadcast %1 : vector<1x50xf32> to vector<200x50xf32>
    %4 = arith.subf %2, %3 : vector<200x50xf32>
    %cst = arith.constant -48.0200043 : f32
    %5 = vector.broadcast %cst : f32 to vector<200x50xf32>
    %6 = arith.mulf %5, %4 : vector<200x50xf32>
    %7 = arith.mulf %6, %4 : vector<200x50xf32>
    %8 = math.exp %7 : vector<200x50xf32>
    %c0_3 = arith.constant 0 : index
    %c0_4 = arith.constant 0 : index
    %9 = vector.load %arg3[%c0_3, %c0_4] : memref<200x50xf32, #tpu.memory_space<vmem>>, vector<200x50xf32>
    tpu.vector_store %arg3[%c0_3, %c0_4], %8 {strides = array<i32>} : memref<200x50xf32, #tpu.memory_space<vmem>>, vector<200x50xf32>,
    return
  }
  func.func @transform_0(%arg0: i32) -> (i32, i32) {
    %c0_i32 = arith.constant 0 : i32
    %c0_i32_0 = arith.constant 0 : i32
    return %arg0, %c0_i32 : i32, i32
  }
  func.func @transform_1(%arg0: i32) -> (i32, i32) {
    %c0_i32 = arith.constant 0 : i32
    %c0_i32_0 = arith.constant 0 : i32
    %c0_i32_1 = arith.constant 0 : i32
    return %c0_i32, %c0_i32_0 : i32, i32
  }
  func.func @transform_2(%arg0: i32) -> (i32, i32) {
    %c0_i32 = arith.constant 0 : i32
    %c0_i32_0 = arith.constant 0 : i32
    return %arg0, %c0_i32 : i32, i32
  }
}

</mosaic_0001>

<llo_original>
// kernel: tpu_custom_call.1
$region0: #{tpu_custom_call.1}
  #allocation0 [shape = 'u32[]', space=smem, size = 0x4, offset = 0x4, fixed_abs, tag = 'smem constant byte address 0x4 - core index']
  #allocation1 [shape = 'u32[144,128]{1,0:T(1,128)}', space=vmem, size = 0x12000, scoped, tag = 'internal scratch']
  %s0 = inlined_call_operand.vmem [shape: f32[200,1], index: 0, kind: input, shape index: {}]
  %s1 = inlined_call_operand.vmem [shape: f32[1,50], index: 1, kind: input, shape index: {}]
  %s2 = inlined_call_operand.vmem [shape: f32[200,50], index: 2, kind: output, shape index: {}]
  %s3 = sld [smem:[#allocation0]]
  $region18: #{tpu_custom_call.1} parent=0
    _
  %s5 = ssub.s32 1, %s3
  %s6 = scalar_select 0, %s5, %s3
  // Predicated region
  $region2: #{tpu_custom_call.1} parent=0 // pred_check
    _
  $region3: #{tpu_custom_call.1} parent=0 // pred_check_branch
    %8 = sbr.rel (0) target = $region5
  $region4: #{tpu_custom_call.1} parent=0 // pred_region
    _
  $region5: #{tpu_custom_call.1} parent=0 // pred_fallthru
    _
  // Predicated region
  $region6: #{tpu_custom_call.1} parent=0 // pred_check
    _
  $region7: #{tpu_custom_call.1} parent=0 // pred_check_branch
    %10 = sbr.rel (0) target = $region9
  $region8: #{tpu_custom_call.1} parent=0 // pred_region
    _
  $region9: #{tpu_custom_call.1} parent=0 // pred_fallthru
    _
  %v11 = vld [vmem:[%s0] sm:$0xff]
  %v12 = vld [vmem:[%s0 + $0x8] sm:$0xff]
  %v13 = vld [vmem:[%s0 + $0x10] sm:$0xff]
  %v14 = vld [vmem:[%s0 + $0x18] sm:$0xff]
  %v15 = vld [vmem:[%s0 + $0x20] sm:$0xff]
  %v16 = vld [vmem:[%s0 + $0x28] sm:$0xff]
  %v17 = vld [vmem:[%s0 + $0x30] sm:$0xff]
  %v18 = vld [vmem:[%s0 + $0x38] sm:$0xff]
  %v19 = vld [vmem:[%s0 + $0x40] sm:$0xff]
  %v20 = vld [vmem:[%s0 + $0x48] sm:$0xff]
  %v21 = vld [vmem:[%s0 + $0x50] sm:$0xff]
  %v22 = vld [vmem:[%s0 + $0x58] sm:$0xff]
  %v23 = vld [vmem:[%s0 + $0x60] sm:$0xff]
  %v24 = vld [vmem:[%s0 + $0x68] sm:$0xff]
  %v25 = vld [vmem:[%s0 + $0x70] sm:$0xff]
  %v26 = vld [vmem:[%s0 + $0x78] sm:$0xff]
  %v27 = vld [vmem:[%s0 + $0x80] sm:$0xff]
  %v28 = vld [vmem:[%s0 + $0x88] sm:$0xff]
  %v29 = vld [vmem:[%s0 + $0x90] sm:$0xff]
  %v30 = vld [vmem:[%s0 + $0x98] sm:$0xff]
  %v31 = vld [vmem:[%s0 + $0xa0] sm:$0xff]
  %v32 = vld [vmem:[%s0 + $0xa8] sm:$0xff]
  %v33 = vld [vmem:[%s0 + $0xb0] sm:$0xff]
  %v34 = vld [vmem:[%s0 + $0xb8] sm:$0xff]
  %v35 = vld [vmem:[%s0 + $0xc0] sm:$0xff]
  %v36 = vld [vmem:[%s1] sm:$0x1]
  %38 = vset.pattern.permute.xlu0 0
  %39 = vperm.xlu0 %38, %v11
  %v40 = vpop.permute.xlu0 %39
  %43 = vset.pattern.permute.xlu0 0
  %44 = vperm.xlu0 %43, %v12
  %v45 = vpop.permute.xlu0 %44
  %48 = vset.pattern.permute.xlu0 0
  %49 = vperm.xlu0 %48, %v13
  %v50 = vpop.permute.xlu0 %49
  %53 = vset.pattern.permute.xlu0 0
  %54 = vperm.xlu0 %53, %v14
  %v55 = vpop.permute.xlu0 %54
  %58 = vset.pattern.permute.xlu0 0
  %59 = vperm.xlu0 %58, %v15
  %v60 = vpop.permute.xlu0 %59
  %63 = vset.pattern.permute.xlu0 0
  %64 = vperm.xlu0 %63, %v16
  %v65 = vpop.permute.xlu0 %64
  %68 = vset.pattern.permute.xlu0 0
  %69 = vperm.xlu0 %68, %v17
  %v70 = vpop.permute.xlu0 %69
  %73 = vset.pattern.permute.xlu0 0
  %74 = vperm.xlu0 %73, %v18
  %v75 = vpop.permute.xlu0 %74
  %78 = vset.pattern.permute.xlu0 0
  %79 = vperm.xlu0 %78, %v19
  %v80 = vpop.permute.xlu0 %79
  %83 = vset.pattern.permute.xlu0 0
  %84 = vperm.xlu0 %83, %v20
  %v85 = vpop.permute.xlu0 %84
  %88 = vset.pattern.permute.xlu0 0
  %89 = vperm.xlu0 %88, %v21
  %v90 = vpop.permute.xlu0 %89
  %93 = vset.pattern.permute.xlu0 0
  %94 = vperm.xlu0 %93, %v22
  %v95 = vpop.permute.xlu0 %94
  %98 = vset.pattern.permute.xlu0 0
  %99 = vperm.xlu0 %98, %v23
  %v100 = vpop.permute.xlu0 %99
  %103 = vset.pattern.permute.xlu0 0
  %104 = vperm.xlu0 %103, %v24
  %v105 = vpop.permute.xlu0 %104
  %108 = vset.pattern.permute.xlu0 0
  %109 = vperm.xlu0 %108, %v25
  %v110 = vpop.permute.xlu0 %109
  %113 = vset.pattern.permute.xlu0 0
  %114 = vperm.xlu0 %113, %v26
  %v115 = vpop.permute.xlu0 %114
  %118 = vset.pattern.permute.xlu0 0
  %119 = vperm.xlu0 %118, %v27
  %v120 = vpop.permute.xlu0 %119
  %123 = vset.pattern.permute.xlu0 0
  %124 = vperm.xlu0 %123, %v28
  %v125 = vpop.permute.xlu0 %124
  %128 = vset.pattern.permute.xlu0 0
  %129 = vperm.xlu0 %128, %v29
  %v130 = vpop.permute.xlu0 %129
  %133 = vset.pattern.permute.xlu0 0
  %134 = vperm.xlu0 %133, %v30
  %v135 = vpop.permute.xlu0 %134
  %138 = vset.pattern.permute.xlu0 0
  %139 = vperm.xlu0 %138, %v31
  %v140 = vpop.permute.xlu0 %139
  %143 = vset.pattern.permute.xlu0 0
  %144 = vperm.xlu0 %143, %v32
  %v145 = vpop.permute.xlu0 %144
  %148 = vset.pattern.permute.xlu0 0
  %149 = vperm.xlu0 %148, %v33
  %v150 = vpop.permute.xlu0 %149
  %153 = vset.pattern.permute.xlu0 0
  %154 = vperm.xlu0 %153, %v34
  %v155 = vpop.permute.xlu0 %154
  %158 = vset.pattern.permute.xlu0 0
  %159 = vperm.xlu0 %158, %v35
  %v160 = vpop.permute.xlu0 %159
  %v163 = vlaneseq
  %v164 = vshrl.u32 %v163, 7
  %v165 = vsub.s32 0, %v164
  %v166 = vrot.slane %v36, %v165
  %v168 = vsub.f32 %v40, %v166
  %v169 = vsub.f32 %v45, %v166
  %v170 = vsub.f32 %v50, %v166
  %v171 = vsub.f32 %v55, %v166
  %v172 = vsub.f32 %v60, %v166
  %v173 = vsub.f32 %v65, %v166
  %v174 = vsub.f32 %v70, %v166
  %v175 = vsub.f32 %v75, %v166
  %v176 = vsub.f32 %v80, %v166
  %v177 = vsub.f32 %v85, %v166
  %v178 = vsub.f32 %v90, %v166
  %v179 = vsub.f32 %v95, %v166
  %v180 = vsub.f32 %v100, %v166
  %v181 = vsub.f32 %v105, %v166
  %v182 = vsub.f32 %v110, %v166
  %v183 = vsub.f32 %v115, %v166
  %v184 = vsub.f32 %v120, %v166
  %v185 = vsub.f32 %v125, %v166
  %v186 = vsub.f32 %v130, %v166
  %v187 = vsub.f32 %v135, %v166
  %v188 = vsub.f32 %v140, %v166
  %v189 = vsub.f32 %v145, %v166
  %v190 = vsub.f32 %v150, %v166
  %v191 = vsub.f32 %v155, %v166
  %v192 = vsub.f32 %v160, %v166
  %v193 = vmul.f32 %v168, -48.020004
  %v194 = vmul.f32 %v169, -48.020004
  %v195 = vmul.f32 %v170, -48.020004
  %v196 = vmul.f32 %v171, -48.020004
  %v197 = vmul.f32 %v172, -48.020004
  %v198 = vmul.f32 %v173, -48.020004
  %v199 = vmul.f32 %v174, -48.020004
  %v200 = vmul.f32 %v175, -48.020004
  %v201 = vmul.f32 %v176, -48.020004
  %v202 = vmul.f32 %v177, -48.020004
  %v203 = vmul.f32 %v178, -48.020004
  %v204 = vmul.f32 %v179, -48.020004
  %v205 = vmul.f32 %v180, -48.020004
  %v206 = vmul.f32 %v181, -48.020004
  %v207 = vmul.f32 %v182, -48.020004
  %v208 = vmul.f32 %v183, -48.020004
  %v209 = vmul.f32 %v184, -48.020004
  %v210 = vmul.f32 %v185, -48.020004
  %v211 = vmul.f32 %v186, -48.020004
  %v212 = vmul.f32 %v187, -48.020004
  %v213 = vmul.f32 %v188, -48.020004
  %v214 = vmul.f32 %v189, -48.020004
  %v215 = vmul.f32 %v190, -48.020004
  %v216 = vmul.f32 %v191, -48.020004
  %v217 = vmul.f32 %v192, -48.020004
  %v218 = vmul.f32 %v193, %v168
  %v219 = vmul.f32 %v194, %v169
  %v220 = vmul.f32 %v195, %v170
  %v221 = vmul.f32 %v196, %v171
  %v222 = vmul.f32 %v197, %v172
  %v223 = vmul.f32 %v198, %v173
  %v224 = vmul.f32 %v199, %v174
  %v225 = vmul.f32 %v200, %v175
  %v226 = vmul.f32 %v201, %v176
  %v227 = vmul.f32 %v202, %v177
  %v228 = vmul.f32 %v203, %v178
  %v229 = vmul.f32 %v204, %v179
  %v230 = vmul.f32 %v205, %v180
  %v231 = vmul.f32 %v206, %v181
  %v232 = vmul.f32 %v207, %v182
  %v233 = vmul.f32 %v208, %v183
  %v234 = vmul.f32 %v209, %v184
  %v235 = vmul.f32 %v210, %v185
  %v236 = vmul.f32 %v211, %v186
  %v237 = vmul.f32 %v212, %v187
  %v238 = vmul.f32 %v213, %v188
  %v239 = vmul.f32 %v214, %v189
  %v240 = vmul.f32 %v215, %v190
  %v241 = vmul.f32 %v216, %v191
  %v242 = vmul.f32 %v217, %v192
  %v243 = vmul.f32 %v218, 1.442695
  %v244 = vpow.pop %v243
  %v245 = vmul.f32 %v219, 1.442695
  %v246 = vpow.pop %v245
  %v247 = vmul.f32 %v220, 1.442695
  %v248 = vpow.pop %v247
  %v249 = vmul.f32 %v221, 1.442695
  %v250 = vpow.pop %v249
  %v251 = vmul.f32 %v222, 1.442695
  %v252 = vpow.pop %v251
  %v253 = vmul.f32 %v223, 1.442695
  %v254 = vpow.pop %v253
  %v255 = vmul.f32 %v224, 1.442695
  %v256 = vpow.pop %v255
  %v257 = vmul.f32 %v225, 1.442695
  %v258 = vpow.pop %v257
  %v259 = vmul.f32 %v226, 1.442695
  %v260 = vpow.pop %v259
  %v261 = vmul.f32 %v227, 1.442695
  %v262 = vpow.pop %v261
  %v263 = vmul.f32 %v228, 1.442695
  %v264 = vpow.pop %v263
  %v265 = vmul.f32 %v229, 1.442695
  %v266 = vpow.pop %v265
  %v267 = vmul.f32 %v230, 1.442695
  %v268 = vpow.pop %v267
  %v269 = vmul.f32 %v231, 1.442695
  %v270 = vpow.pop %v269
  %v271 = vmul.f32 %v232, 1.442695
  %v272 = vpow.pop %v271
  %v273 = vmul.f32 %v233, 1.442695
  %v274 = vpow.pop %v273
  %v275 = vmul.f32 %v234, 1.442695
  %v276 = vpow.pop %v275
  %v277 = vmul.f32 %v235, 1.442695
  %v278 = vpow.pop %v277
  %v279 = vmul.f32 %v236, 1.442695
  %v280 = vpow.pop %v279
  %v281 = vmul.f32 %v237, 1.442695
  %v282 = vpow.pop %v281
  %v283 = vmul.f32 %v238, 1.442695
  %v284 = vpow.pop %v283
  %v285 = vmul.f32 %v239, 1.442695
  %v286 = vpow.pop %v285
  %v287 = vmul.f32 %v240, 1.442695
  %v288 = vpow.pop %v287
  %v289 = vmul.f32 %v241, 1.442695
  %v290 = vpow.pop %v289
  %v291 = vmul.f32 %v242, 1.442695
  %v292 = vpow.pop %v291
  %vm293 = vcmask 408576
  %294 = vst.msk [vmem:[%s2] sm:$0xff] %vm293, %v244
  %295 = vst.msk [vmem:[%s2 + $0x8] sm:$0xff] %vm293, %v246
  %296 = vst.msk [vmem:[%s2 + $0x10] sm:$0xff] %vm293, %v248
  %297 = vst.msk [vmem:[%s2 + $0x18] sm:$0xff] %vm293, %v250
  %298 = vst.msk [vmem:[%s2 + $0x20] sm:$0xff] %vm293, %v252
  %299 = vst.msk [vmem:[%s2 + $0x28] sm:$0xff] %vm293, %v254
  %300 = vst.msk [vmem:[%s2 + $0x30] sm:$0xff] %vm293, %v256
  %301 = vst.msk [vmem:[%s2 + $0x38] sm:$0xff] %vm293, %v258
  %302 = vst.msk [vmem:[%s2 + $0x40] sm:$0xff] %vm293, %v260
  %303 = vst.msk [vmem:[%s2 + $0x48] sm:$0xff] %vm293, %v262
  %304 = vst.msk [vmem:[%s2 + $0x50] sm:$0xff] %vm293, %v264
  %305 = vst.msk [vmem:[%s2 + $0x58] sm:$0xff] %vm293, %v266
  %306 = vst.msk [vmem:[%s2 + $0x60] sm:$0xff] %vm293, %v268
  %307 = vst.msk [vmem:[%s2 + $0x68] sm:$0xff] %vm293, %v270
  %308 = vst.msk [vmem:[%s2 + $0x70] sm:$0xff] %vm293, %v272
  %309 = vst.msk [vmem:[%s2 + $0x78] sm:$0xff] %vm293, %v274
  %310 = vst.msk [vmem:[%s2 + $0x80] sm:$0xff] %vm293, %v276
  %311 = vst.msk [vmem:[%s2 + $0x88] sm:$0xff] %vm293, %v278
  %312 = vst.msk [vmem:[%s2 + $0x90] sm:$0xff] %vm293, %v280
  %313 = vst.msk [vmem:[%s2 + $0x98] sm:$0xff] %vm293, %v282
  %314 = vst.msk [vmem:[%s2 + $0xa0] sm:$0xff] %vm293, %v284
  %315 = vst.msk [vmem:[%s2 + $0xa8] sm:$0xff] %vm293, %v286
  %316 = vst.msk [vmem:[%s2 + $0xb0] sm:$0xff] %vm293, %v288
  %317 = vst.msk [vmem:[%s2 + $0xb8] sm:$0xff] %vm293, %v290
  %318 = vst.msk [vmem:[%s2 + $0xc0] sm:$0xff] %vm293, %v292
  // Predicated region
  $region10: #{tpu_custom_call.1} parent=0 // pred_check
    _
  $region11: #{tpu_custom_call.1} parent=0 // pred_check_branch
    %320 = sbr.rel (0) target = $region13
  $region12: #{tpu_custom_call.1} parent=0 // pred_region
    _
  $region13: #{tpu_custom_call.1} parent=0 // pred_fallthru
    _
  // Predicated region
  $region14: #{tpu_custom_call.1} parent=0 // pred_check
    _
  $region15: #{tpu_custom_call.1} parent=0 // pred_check_branch
    %322 = sbr.rel (0) target = $region17
  $region16: #{tpu_custom_call.1} parent=0 // pred_region
    _
  $region17: #{tpu_custom_call.1} parent=0 // pred_fallthru
    _

</llo_original>
